<compile_context>
chip_gen: v7x
topology: tpu7x:2x2x1
jax: 0.10.0
libtpu: 0.0.40
codegen_flags: <defaults>
</compile_context>

<pallas_src>
import functools

import jax
import jax.numpy as jnp
from jax.experimental import pallas as pl
from jax.experimental.pallas import tpu as pltpu


def gru_unit_kernel(hx_ref, m_ref, w1_ref, w1nh_ref, b1_ref, w2_ref, b2_ref,
                    out_ref, *, latent_dim, n_pad):
    hx = hx_ref[...]                      # (B, L+I) = [h | x]
    h = hx[:, :latent_dim]                # (B, L)
    m = m_ref[...]                        # (B, 1)

    # Fused first layer: [h|x] @ [W1u | W1r | W1n(x-rows only)] + [b1u|b1r|b1n]
    pre = jnp.dot(hx, w1_ref[...],
                  preferred_element_type=jnp.float32) + b1_ref[...]   # (B, 3*n_pad)

    hid_u = jnp.tanh(pre[:, 0 * n_pad:1 * n_pad])        # (B, n_pad)
    hid_r = jnp.tanh(pre[:, 1 * n_pad:2 * n_pad])        # (B, n_pad)

    # Second layers (stacked weight slab, padded rows are zero).
    u = jax.nn.sigmoid(
        jnp.dot(hid_u, w2_ref[0], preferred_element_type=jnp.float32) + b2_ref[0])
    r = jax.nn.sigmoid(
        jnp.dot(hid_r, w2_ref[1], preferred_element_type=jnp.float32) + b2_ref[1])

    # New-state hidden: x-contribution already computed in the fused matmul;
    # add the (r*h) @ W1n_h path now that r is known.
    pre_n = pre[:, 2 * n_pad:3 * n_pad] + jnp.dot(
        r * h, w1nh_ref[...], preferred_element_type=jnp.float32)
    hid_n = jnp.tanh(pre_n)
    n = jnp.dot(hid_n, w2_ref[2], preferred_element_type=jnp.float32) + b2_ref[2]

    h_next = (1.0 - u) * n + u * h
    out_ref[...] = m * h_next + (1.0 - m) * h


def gru_unit_pallas(h_cur, x, mask_f, packed):
    B, L = h_cur.shape
    w1, w1nh, b1, w2, b2 = packed
    n_pad = w1nh.shape[1]
    hx = jnp.concatenate([h_cur, x], axis=-1)            # (B, L+I)

    kernel = functools.partial(gru_unit_kernel, latent_dim=L, n_pad=n_pad)
    vmem = pl.BlockSpec(memory_space=pltpu.MemorySpace.VMEM)
    return pl.pallas_call(
        kernel,
        out_shape=jax.ShapeDtypeStruct((B, L), jnp.float32),
        in_specs=[vmem] * 7,
        out_specs=vmem,
    )(hx, mask_f, w1, w1nh, b1, w2, b2)


def make_raw_params(key, latent_dim, input_dim, n_units, std=0.1):
    """Deterministic init matching init_network_weights: W ~ N(0, std), b = 0.
    Weights in (in, out) layout. Returns raw (unfused, unpadded) params."""
    ks = jax.random.split(key, 6)

    def lin(k, n_in, n_out):
        return std * jax.random.normal(k, (n_in, n_out), jnp.float32)

    w1u = lin(ks[0], latent_dim + input_dim, n_units)
    w2u = lin(ks[1], n_units, latent_dim)
    w1r = lin(ks[2], latent_dim + input_dim, n_units)
    w2r = lin(ks[3], n_units, latent_dim)
    # new_state_net input is cat([x, r*h]) -> first input_dim rows act on x.
    w1n = lin(ks[4], input_dim + latent_dim, n_units)
    w2n = lin(ks[5], n_units, latent_dim)

    zU = jnp.zeros((n_units,), jnp.float32)
    zL = jnp.zeros((latent_dim,), jnp.float32)
    return (w1u, zU, w2u, zL, w1r, zU, w2r, zL, w1n, zU, w2n, zL)


def pack_params(raw, latent_dim, input_dim, n_units, n_pad=128):
    """Fuse + pad raw params into the kernel's packed slabs."""
    (w1u, b1u, w2u, b2u, w1r, b1r, w2r, b2r, w1n, b1n, w2n, b2n) = raw
    L, I = latent_dim, input_dim
    pc = n_pad - n_units

    def pad_cols(w):
        return jnp.pad(w, ((0, 0), (0, pc)))

    def pad_rows(w):
        return jnp.pad(w, ((0, pc), (0, 0)))

    w1n_x = pad_cols(w1n[:I])       # (I, n_pad) acts on x
    w1n_h = pad_cols(w1n[I:])       # (L, n_pad) acts on r*h (kept separate)

    # Fused first-layer slab, applied to [h | x]; n-block h-rows are zero.
    w1n_block = jnp.concatenate(
        [jnp.zeros((L, n_pad), jnp.float32), w1n_x], axis=0)          # (L+I, n_pad)
    W1 = jnp.concatenate([pad_cols(w1u), pad_cols(w1r), w1n_block], axis=1)  # (L+I, 3*n_pad)

    B1 = jnp.concatenate([jnp.pad(b1u, (0, pc)),
                          jnp.pad(b1r, (0, pc)),
                          jnp.pad(b1n, (0, pc))])[None, :]             # (1, 3*n_pad)

    W2 = jnp.stack([pad_rows(w2u), pad_rows(w2r), pad_rows(w2n)], axis=0)  # (3, n_pad, L)
    B2 = jnp.stack([b2u, b2r, b2n], axis=0)[:, None, :]                     # (3, 1, L)

    return (W1, w1n_h, B1, W2, B2)


def gru_unit_ref(h, x, mask_f, raw):
    """Pure-JAX reference on the raw (unfused, unpadded) weights."""
    (w1u, b1u, w2u, b2u, w1r, b1r, w2r, b2r, w1n, b1n, w2n, b2n) = raw
    hx = jnp.concatenate([h, x], axis=-1)
    u = jax.nn.sigmoid(jnp.tanh(hx @ w1u + b1u) @ w2u + b2u)
    r = jax.nn.sigmoid(jnp.tanh(hx @ w1r + b1r) @ w2r + b2r)
    comb = jnp.concatenate([x, r * h], axis=-1)
    n = jnp.tanh(comb @ w1n + b1n) @ w2n + b2n
    h_next = (1.0 - u) * n + u * h
    return mask_f * h_next + (1.0 - mask_f) * h


if __name__ == "__main__":
    B, latent_dim, input_dim, n_units = 8, 32, 16, 100

    key = jax.random.PRNGKey(0)
    k_h, k_x, k_m, k_p = jax.random.split(key, 4)

    h_cur = jax.random.normal(k_h, (B, latent_dim), jnp.float32)
    x = jax.random.normal(k_x, (B, input_dim), jnp.float32)
    mask_bool = jax.random.bernoulli(k_m, 0.5, (B,))
    mask_f = mask_bool.astype(jnp.float32)[:, None]        # (B, 1)

    raw = make_raw_params(k_p, latent_dim, input_dim, n_units)
    packed = pack_params(raw, latent_dim, input_dim, n_units, n_pad=128)

    out = gru_unit_pallas(h_cur, x, mask_f, packed)
    out = jax.block_until_ready(out)

    ref = gru_unit_ref(h_cur, x, mask_f, raw)
    assert out.shape == (B, latent_dim)
    assert jnp.allclose(out, ref, atol=1e-5, rtol=1e-5)

    print("KERNEL_OK")
</pallas_src>

<mosaic_0001>
module attributes {stable_mosaic.version = 11 : i64} {
  func.func @gru_unit_kernel(%arg0: memref<8x48xf32, #tpu.memory_space<vmem>>, %arg1: memref<8x1xf32, #tpu.memory_space<vmem>>, %arg2: memref<48x384xf32, #tpu.memory_space<vmem>>, %arg3: memref<32x128xf32, #tpu.memory_space<vmem>>, %arg4: memref<1x384xf32, #tpu.memory_space<vmem>>, %arg5: memref<3x128x32xf32, #tpu.memory_space<vmem>>, %arg6: memref<3x1x32xf32, #tpu.memory_space<vmem>>, %arg7: memref<8x32xf32, #tpu.memory_space<vmem>>) attributes {dimension_semantics = [], scalar_prefetch = 0 : i64, scratch_operands = 0 : i64, tpu.core_type = #tpu.core_type<tc>} {
    %c0 = arith.constant 0 : index
    %c0_0 = arith.constant 0 : index
    %0 = vector.load %arg0[%c0, %c0_0] : memref<8x48xf32, #tpu.memory_space<vmem>>, vector<8x48xf32>
    %1 = vector.extract_strided_slice %0 {offsets = [0, 0], sizes = [8, 32], strides = [1, 1]} : vector<8x48xf32> to vector<8x32xf32>
    %c0_1 = arith.constant 0 : index
    %c0_2 = arith.constant 0 : index
    %2 = vector.load %arg1[%c0_1, %c0_2] : memref<8x1xf32, #tpu.memory_space<vmem>>, vector<8x1xf32>
    %c0_3 = arith.constant 0 : index
    %c0_4 = arith.constant 0 : index
    %3 = vector.load %arg2[%c0_3, %c0_4] : memref<48x384xf32, #tpu.memory_space<vmem>>, vector<48x384xf32>
    %cst = arith.constant dense<0.000000e+00> : vector<8x384xf32>
    %4 = tpu.matmul %0, %3, %cst {dimension_numbers = #tpu.dot_dimension_numbers<[1], [0], [0], [1], [0, 0, 1, 1], [], []>} : vector<8x48xf32>, vector<48x384xf32>, vector<8x384xf32> -> vector<8x384xf32>
    %c0_5 = arith.constant 0 : index
    %c0_6 = arith.constant 0 : index
    %5 = vector.load %arg4[%c0_5, %c0_6] : memref<1x384xf32, #tpu.memory_space<vmem>>, vector<1x384xf32>
    %6 = vector.broadcast %5 : vector<1x384xf32> to vector<8x384xf32>
    %7 = arith.addf %4, %6 : vector<8x384xf32>
    %8 = vector.extract_strided_slice %7 {offsets = [0, 0], sizes = [8, 128], strides = [1, 1]} : vector<8x384xf32> to vector<8x128xf32>
    %9 = math.tanh %8 : vector<8x128xf32>
    %10 = vector.extract_strided_slice %7 {offsets = [0, 128], sizes = [8, 128], strides = [1, 1]} : vector<8x384xf32> to vector<8x128xf32>
    %11 = math.tanh %10 : vector<8x128xf32>
    %c0_7 = arith.constant 0 : index
    %c0_8 = arith.constant 0 : index
    %c0_9 = arith.constant 0 : index
    %12 = vector.load %arg5[%c0_7, %c0_8, %c0_9] : memref<3x128x32xf32, #tpu.memory_space<vmem>>, vector<1x128x32xf32>
    %13 = vector.shape_cast %12 : vector<1x128x32xf32> to vector<128x32xf32>
    %cst_10 = arith.constant dense<0.000000e+00> : vector<8x32xf32>
    %14 = tpu.matmul %9, %13, %cst_10 {dimension_numbers = #tpu.dot_dimension_numbers<[1], [0], [0], [1], [0, 0, 1, 1], [], []>} : vector<8x128xf32>, vector<128x32xf32>, vector<8x32xf32> -> vector<8x32xf32>
    %c0_11 = arith.constant 0 : index
    %c0_12 = arith.constant 0 : index
    %c0_13 = arith.constant 0 : index
    %15 = vector.load %arg6[%c0_11, %c0_12, %c0_13] : memref<3x1x32xf32, #tpu.memory_space<vmem>>, vector<1x1x32xf32>
    %16 = vector.shape_cast %15 : vector<1x1x32xf32> to vector<1x32xf32>
    %17 = vector.broadcast %16 : vector<1x32xf32> to vector<8x32xf32>
    %18 = arith.addf %14, %17 : vector<8x32xf32>
    %19 = arith.negf %18 : vector<8x32xf32>
    %20 = math.exp %19 : vector<8x32xf32>
    %cst_14 = arith.constant 1.000000e+00 : f32
    %21 = vector.broadcast %cst_14 : f32 to vector<8x32xf32>
    %22 = arith.addf %21, %20 : vector<8x32xf32>
    %23 = arith.divf %21, %22 : vector<8x32xf32>
    %c1 = arith.constant 1 : index
    %c0_15 = arith.constant 0 : index
    %c0_16 = arith.constant 0 : index
    %24 = vector.load %arg5[%c1, %c0_15, %c0_16] : memref<3x128x32xf32, #tpu.memory_space<vmem>>, vector<1x128x32xf32>
    %25 = vector.shape_cast %24 : vector<1x128x32xf32> to vector<128x32xf32>
    %cst_17 = arith.constant dense<0.000000e+00> : vector<8x32xf32>
    %26 = tpu.matmul %11, %25, %cst_17 {dimension_numbers = #tpu.dot_dimension_numbers<[1], [0], [0], [1], [0, 0, 1, 1], [], []>} : vector<8x128xf32>, vector<128x32xf32>, vector<8x32xf32> -> vector<8x32xf32>
    %c1_18 = arith.constant 1 : index
    %c0_19 = arith.constant 0 : index
    %c0_20 = arith.constant 0 : index
    %27 = vector.load %arg6[%c1_18, %c0_19, %c0_20] : memref<3x1x32xf32, #tpu.memory_space<vmem>>, vector<1x1x32xf32>
    %28 = vector.shape_cast %27 : vector<1x1x32xf32> to vector<1x32xf32>
    %29 = vector.broadcast %28 : vector<1x32xf32> to vector<8x32xf32>
    %30 = arith.addf %26, %29 : vector<8x32xf32>
    %31 = arith.negf %30 : vector<8x32xf32>
    %32 = math.exp %31 : vector<8x32xf32>
    %cst_21 = arith.constant 1.000000e+00 : f32
    %33 = vector.broadcast %cst_21 : f32 to vector<8x32xf32>
    %34 = arith.addf %33, %32 : vector<8x32xf32>
    %35 = arith.divf %33, %34 : vector<8x32xf32>
    %36 = vector.extract_strided_slice %7 {offsets = [0, 256], sizes = [8, 128], strides = [1, 1]} : vector<8x384xf32> to vector<8x128xf32>
    %37 = arith.mulf %35, %1 : vector<8x32xf32>
    %c0_22 = arith.constant 0 : index
    %c0_23 = arith.constant 0 : index
    %38 = vector.load %arg3[%c0_22, %c0_23] : memref<32x128xf32, #tpu.memory_space<vmem>>, vector<32x128xf32>
    %cst_24 = arith.constant dense<0.000000e+00> : vector<8x128xf32>
    %39 = tpu.matmul %37, %38, %cst_24 {dimension_numbers = #tpu.dot_dimension_numbers<[1], [0], [0], [1], [0, 0, 1, 1], [], []>} : vector<8x32xf32>, vector<32x128xf32>, vector<8x128xf32> -> vector<8x128xf32>
    %40 = arith.addf %36, %39 : vector<8x128xf32>
    %41 = math.tanh %40 : vector<8x128xf32>
    %c2 = arith.constant 2 : index
    %c0_25 = arith.constant 0 : index
    %c0_26 = arith.constant 0 : index
    %42 = vector.load %arg5[%c2, %c0_25, %c0_26] : memref<3x128x32xf32, #tpu.memory_space<vmem>>, vector<1x128x32xf32>
    %43 = vector.shape_cast %42 : vector<1x128x32xf32> to vector<128x32xf32>
    %cst_27 = arith.constant dense<0.000000e+00> : vector<8x32xf32>
    %44 = tpu.matmul %41, %43, %cst_27 {dimension_numbers = #tpu.dot_dimension_numbers<[1], [0], [0], [1], [0, 0, 1, 1], [], []>} : vector<8x128xf32>, vector<128x32xf32>, vector<8x32xf32> -> vector<8x32xf32>
    %c2_28 = arith.constant 2 : index
    %c0_29 = arith.constant 0 : index
    %c0_30 = arith.constant 0 : index
    %45 = vector.load %arg6[%c2_28, %c0_29, %c0_30] : memref<3x1x32xf32, #tpu.memory_space<vmem>>, vector<1x1x32xf32>
    %46 = vector.shape_cast %45 : vector<1x1x32xf32> to vector<1x32xf32>
    %47 = vector.broadcast %46 : vector<1x32xf32> to vector<8x32xf32>
    %48 = arith.addf %44, %47 : vector<8x32xf32>
    %cst_31 = arith.constant 1.000000e+00 : f32
    %49 = vector.broadcast %cst_31 : f32 to vector<8x32xf32>
    %50 = arith.subf %49, %23 : vector<8x32xf32>
    %51 = arith.mulf %50, %48 : vector<8x32xf32>
    %52 = arith.mulf %23, %1 : vector<8x32xf32>
    %53 = arith.addf %51, %52 : vector<8x32xf32>
    %54 = vector.broadcast %2 : vector<8x1xf32> to vector<8x32xf32>
    %55 = arith.mulf %54, %53 : vector<8x32xf32>
    %cst_32 = arith.constant 1.000000e+00 : f32
    %56 = vector.broadcast %cst_32 : f32 to vector<8x1xf32>
    %57 = arith.subf %56, %2 : vector<8x1xf32>
    %58 = vector.broadcast %57 : vector<8x1xf32> to vector<8x32xf32>
    %59 = arith.mulf %58, %1 : vector<8x32xf32>
    %60 = arith.addf %55, %59 : vector<8x32xf32>
    %c0_33 = arith.constant 0 : index
    %c0_34 = arith.constant 0 : index
    %61 = vector.load %arg7[%c0_33, %c0_34] : memref<8x32xf32, #tpu.memory_space<vmem>>, vector<8x32xf32>
    tpu.vector_store %arg7[%c0_33, %c0_34], %60 {strides = array<i32>} : memref<8x32xf32, #tpu.memory_space<vmem>>, vector<8x32xf32>,
    return
  }
}

</mosaic_0001>

<llo_original>
// kernel: tpu_custom_call.1
$region0: #{tpu_custom_call.1}
  #allocation0 [shape = 'u32[]', space=smem, size = 0x4, offset = 0x4, fixed_abs, tag = 'smem constant byte address 0x4 - core index']
  #allocation1 [shape = 'u32[144,128]{1,0:T(1,128)}', space=vmem, size = 0x12000, scoped, tag = 'internal scratch']
  %s0 = inlined_call_operand.vmem [shape: f32[8,48], index: 0, kind: input, shape index: {}]
  %s1 = inlined_call_operand.vmem [shape: f32[8,1], index: 1, kind: input, shape index: {}]
  %s2 = inlined_call_operand.vmem [shape: f32[48,384], index: 2, kind: input, shape index: {}]
  %s3 = inlined_call_operand.vmem [shape: f32[32,128], index: 3, kind: input, shape index: {}]
  %s4 = inlined_call_operand.vmem [shape: f32[1,384], index: 4, kind: input, shape index: {}]
  %s5 = inlined_call_operand.vmem [shape: f32[3,128,32], index: 5, kind: input, shape index: {}]
  %s6 = inlined_call_operand.vmem [shape: f32[3,1,32], index: 6, kind: input, shape index: {}]
  %s7 = inlined_call_operand.hbm [shape: f32[8,32], index: 7, kind: output, shape index: {}]
  %s8 = sld [smem:[#allocation0]]
  $region38: #{tpu_custom_call.1} parent=0
    _
  %s10 = ssub.s32 1, %s8
  %s11 = scalar_select 0, %s10, %s8
  $region1: #{tpu_custom_call.1} parent=0
    #allocation2 [shape = 'u8[4096]{0}', space=vmem, size = 0x1000, scoped, tag = 'output window, operand 0, single buffered']
    #allocation3 [shape = 's32[1]{0}', space=sflag, size = 0x4, scoped, tag = 'scoped memory for tpu_custom_call.1']
    %12 = vsyncpa [#allocation3], 0
    // Predicated region
    $region2: #{tpu_custom_call.1} parent=1 // pred_check
      _
    $region3: #{tpu_custom_call.1} parent=1 // pred_check_branch
      %14 = sbr.rel (0) target = $region5
    $region4: #{tpu_custom_call.1} parent=1 // pred_region
      _
    $region5: #{tpu_custom_call.1} parent=1 // pred_fallthru
      _
    // Predicated region
    $region6: #{tpu_custom_call.1} parent=1 // pred_check
      _
    $region7: #{tpu_custom_call.1} parent=1 // pred_check_branch
      %16 = sbr.rel (0) target = $region9
    $region8: #{tpu_custom_call.1} parent=1 // pred_region
      _
    $region9: #{tpu_custom_call.1} parent=1 // pred_fallthru
      _
    // Predicated region
    $region10: #{tpu_custom_call.1} parent=1 // pred_check
      _
    $region11: #{tpu_custom_call.1} parent=1 // pred_check_branch
      %18 = sbr.rel (0) target = $region13
    $region12: #{tpu_custom_call.1} parent=1 // pred_region
      _
    $region13: #{tpu_custom_call.1} parent=1 // pred_fallthru
      _
    // Predicated region
    $region14: #{tpu_custom_call.1} parent=1 // pred_check
      _
    $region15: #{tpu_custom_call.1} parent=1 // pred_check_branch
      %20 = sbr.rel (0) target = $region17
    $region16: #{tpu_custom_call.1} parent=1 // pred_region
      _
    $region17: #{tpu_custom_call.1} parent=1 // pred_fallthru
      _
    // Predicated region
    $region18: #{tpu_custom_call.1} parent=1 // pred_check
      _
    $region19: #{tpu_custom_call.1} parent=1 // pred_check_branch
      %22 = sbr.rel (0) target = $region21
    $region20: #{tpu_custom_call.1} parent=1 // pred_region
      _
    $region21: #{tpu_custom_call.1} parent=1 // pred_fallthru
      _
    // Predicated region
    $region22: #{tpu_custom_call.1} parent=1 // pred_check
      _
    $region23: #{tpu_custom_call.1} parent=1 // pred_check_branch
      %24 = sbr.rel (0) target = $region25
    $region24: #{tpu_custom_call.1} parent=1 // pred_region
      _
    $region25: #{tpu_custom_call.1} parent=1 // pred_fallthru
      _
    // Predicated region
    $region26: #{tpu_custom_call.1} parent=1 // pred_check
      _
    $region27: #{tpu_custom_call.1} parent=1 // pred_check_branch
      %26 = sbr.rel (0) target = $region29
    $region28: #{tpu_custom_call.1} parent=1 // pred_region
      _
    $region29: #{tpu_custom_call.1} parent=1 // pred_fallthru
      _
    %v27 = vld [vmem:[%s0] sm:$0xff]
    %v28 = vld [vmem:[%s1] sm:$0xff]
    %v29 = vld [vmem:[%s2] sm:$0xff]
    %v30 = vld [vmem:[%s2 + $0x8] sm:$0xff]
    %v31 = vld [vmem:[%s2 + $0x10] sm:$0xff]
    %v32 = vld [vmem:[%s2 + $0x18] sm:$0xff]
    %v33 = vld [vmem:[%s2 + $0x20] sm:$0xff]
    %v34 = vld [vmem:[%s2 + $0x28] sm:$0xff]
    %v35 = vld [vmem:[%s2 + $0x30] sm:$0xff]
    %v36 = vld [vmem:[%s2 + $0x38] sm:$0xff]
    %v37 = vld [vmem:[%s2 + $0x40] sm:$0xff]
    %v38 = vld [vmem:[%s2 + $0x48] sm:$0xff]
    %v39 = vld [vmem:[%s2 + $0x50] sm:$0xff]
    %v40 = vld [vmem:[%s2 + $0x58] sm:$0xff]
    %v41 = vld [vmem:[%s2 + $0x60] sm:$0xff]
    %v42 = vld [vmem:[%s2 + $0x68] sm:$0xff]
    %v43 = vld [vmem:[%s2 + $0x70] sm:$0xff]
    %v44 = vld [vmem:[%s2 + $0x78] sm:$0xff]
    %v45 = vld [vmem:[%s2 + $0x80] sm:$0xff]
    %v46 = vld [vmem:[%s2 + $0x88] sm:$0xff]
    %v47 = vld [vmem:[%s4] sm:$0x7]
    %v49 = vlaneseq
    %v50 = vshrl.u32 %v49, 7
    %v51 = vsub.s32 0, %v50
    %v52 = vrot.slane %v47, %v51
    %v53 = vlaneseq
    %v54 = vshrl.u32 %v53, 7
    %v55 = vsub.s32 1, %v54
    %v56 = vrot.slane %v47, %v55
    %v57 = vlaneseq
    %v58 = vshrl.u32 %v57, 7
    %v59 = vsub.s32 2, %v58
    %v60 = vrot.slane %v47, %v59
    %vm64 = vcmask 392192
    %v66 = vsel %vm64, %v27, 0
    %68 = vmatprep.subr.mxu0 %v30
    %69 = vmatpush1.msra.mxu0 %v29
    %70 = vmatprep.subr.mxu0 %v33
    %71 = vmatpush1.msra.mxu0 %v32
    %72 = vmatprep.subr.mxu0 %v36
    %73 = vmatpush1.msra.mxu0 %v35
    %74 = vmatprep.subr.mxu0 %v39
    %75 = vmatpush1.msra.mxu0 %v38
    %76 = vmatprep.subr.mxu0 %v42
    %77 = vmatpush1.msra.mxu0 %v41
    %78 = vmatprep.subr.mxu0 %v45
    %79 = vmatpush1.msra.mxu0 %v44
    %80 = vmatprep.subr.mxu0 0.0
    %81 = vmatpush1.msra.mxu0 0.0
    %82 = vmatprep.subr.mxu0 0.0
    %83 = vmatpush1.msra.mxu0 0.0
    %84 = vmatprep.subr.mxu0 0.0
    %85 = vmatpush1.msra.mxu0 0.0
    %86 = vmatprep.subr.mxu0 0.0
    %87 = vmatpush1.msra.mxu0 0.0
    %88 = vmatprep.subr.mxu0 0.0
    %89 = vmatpush1.msra.mxu0 0.0
    %90 = vmatprep.subr.mxu0 0.0
    %91 = vmatpush1.msra.mxu0 0.0
    %92 = vmatprep.subr.mxu0 0.0
    %93 = vmatpush1.msra.mxu0 0.0
    %94 = vmatprep.subr.mxu0 0.0
    %95 = vmatpush1.msra.mxu0 0.0
    %96 = vmatprep.subr.mxu0 0.0
    %97 = vmatpush1.msra.mxu0 0.0
    %98 = vmatprep.subr.mxu0 0.0
    %99 = vmatpush1.msra.mxu0 0.0
    %100 = vmatprep.subr.mxu0 0.0
    %101 = vmatpush1.msra.mxu0 0.0
    %102 = vmatprep.subr.mxu0 0.0
    %103 = vmatpush1.msra.mxu0 0.0
    %104 = vmatprep.subr.mxu0 0.0
    %105 = vmatpush1.msra.mxu0 0.0
    %106 = vmatprep.subr.mxu0 0.0
    %107 = vmatpush1.msra.mxu0 0.0
    %108 = vmatprep.subr.mxu0 0.0
    %109 = vmatpush1.msra.mxu0 0.0
    %110 = vmatprep.subr.mxu0 0.0
    %111 = vmatpush1.msra.mxu0 0.0
    %112 = vmatprep.subr.mxu0 0.0
    %113 = vmatpush1.msra.mxu0 0.0
    %114 = vmatprep.subr.mxu0 0.0
    %115 = vmatpush1.msra.mxu0 0.0
    %116 = vmatprep.subr.mxu0 0.0
    %117 = vmatpush1.msra.mxu0 0.0
    %118 = vmatprep.subr.mxu0 0.0
    %119 = vmatpush1.msra.mxu0 0.0
    %120 = vmatprep.subr.mxu0 0.0
    %121 = vmatpush1.msra.mxu0 0.0
    %122 = vmatprep.subr.mxu0 0.0
    %123 = vmatpush1.msra.mxu0 0.0
    %124 = vmatprep.subr.mxu0 0.0
    %125 = vmatpush1.msra.mxu0 0.0
    %126 = vmatprep.subr.mxu0 0.0
    %127 = vmatpush1.msra.mxu0 0.0
    %128 = vmatprep.subr.mxu0 0.0
    %129 = vmatpush1.msra.mxu0 0.0
    %130 = vmatprep.subr.mxu0 0.0
    %131 = vmatpush1.msra.mxu0 0.0
    %132 = vmatprep.mubr.f32.mxu0 0.0
    %133 = vmatmul.mubr.f32.gmra.mrb[0].mxu0 %v66
    %v134 = vpop.f32.mrb[0].mxu0
    %v135 = vadd.f32 %v52, %v134
    %v136 = vpop.f32.mrb[0].mxu0
    %v137 = vadd.f32 %v56, %v136
    %138 = vdwg.mxu0
    %139 = vmatprep.subr.mxu0 0.0
    %140 = vmatpush1.msra.mxu0 %v31
    %141 = vmatprep.subr.mxu0 0.0
    %142 = vmatpush1.msra.mxu0 %v34
    %143 = vmatprep.subr.mxu0 0.0
    %144 = vmatpush1.msra.mxu0 %v37
    %145 = vmatprep.subr.mxu0 0.0
    %146 = vmatpush1.msra.mxu0 %v40
    %147 = vmatprep.subr.mxu0 0.0
    %148 = vmatpush1.msra.mxu0 %v43
    %149 = vmatprep.subr.mxu0 0.0
    %150 = vmatpush1.msra.mxu0 %v46
    %151 = vmatprep.subr.mxu0 0.0
    %152 = vmatpush1.msra.mxu0 0.0
    %153 = vmatprep.subr.mxu0 0.0
    %154 = vmatpush1.msra.mxu0 0.0
    %155 = vmatprep.subr.mxu0 0.0
    %156 = vmatpush1.msra.mxu0 0.0
    %157 = vmatprep.subr.mxu0 0.0
    %158 = vmatpush1.msra.mxu0 0.0
    %159 = vmatprep.subr.mxu0 0.0
    %160 = vmatpush1.msra.mxu0 0.0
    %161 = vmatprep.subr.mxu0 0.0
    %162 = vmatpush1.msra.mxu0 0.0
    %163 = vmatprep.subr.mxu0 0.0
    %164 = vmatpush1.msra.mxu0 0.0
    %165 = vmatprep.subr.mxu0 0.0
    %166 = vmatpush1.msra.mxu0 0.0
    %167 = vmatprep.subr.mxu0 0.0
    %168 = vmatpush1.msra.mxu0 0.0
    %169 = vmatprep.subr.mxu0 0.0
    %170 = vmatpush1.msra.mxu0 0.0
    %171 = vmatprep.subr.mxu0 0.0
    %172 = vmatpush1.msra.mxu0 0.0
    %173 = vmatprep.subr.mxu0 0.0
    %174 = vmatpush1.msra.mxu0 0.0
    %175 = vmatprep.subr.mxu0 0.0
    %176 = vmatpush1.msra.mxu0 0.0
    %177 = vmatprep.subr.mxu0 0.0
    %178 = vmatpush1.msra.mxu0 0.0
    %179 = vmatprep.subr.mxu0 0.0
    %180 = vmatpush1.msra.mxu0 0.0
    %181 = vmatprep.subr.mxu0 0.0
    %182 = vmatpush1.msra.mxu0 0.0
    %183 = vmatprep.subr.mxu0 0.0
    %184 = vmatpush1.msra.mxu0 0.0
    %185 = vmatprep.subr.mxu0 0.0
    %186 = vmatpush1.msra.mxu0 0.0
    %187 = vmatprep.subr.mxu0 0.0
    %188 = vmatpush1.msra.mxu0 0.0
    %189 = vmatprep.subr.mxu0 0.0
    %190 = vmatpush1.msra.mxu0 0.0
    %191 = vmatprep.subr.mxu0 0.0
    %192 = vmatpush1.msra.mxu0 0.0
    %193 = vmatprep.subr.mxu0 0.0
    %194 = vmatpush1.msra.mxu0 0.0
    %195 = vmatprep.subr.mxu0 0.0
    %196 = vmatpush1.msra.mxu0 0.0
    %197 = vmatprep.subr.mxu0 0.0
    %198 = vmatpush1.msra.mxu0 0.0
    %199 = vmatprep.subr.mxu0 0.0
    %200 = vmatpush1.msra.mxu0 0.0
    %201 = vmatprep.subr.mxu0 0.0
    %202 = vmatpush1.msra.mxu0 0.0
    %203 = vmatprep.mubr.f32.mxu0 0.0
    %204 = vmatmul.mubr.f32.gmra.mrb[0].mxu0 %v66
    %v205 = vpop.f32.mrb[0].mxu0
    %v206 = vadd.f32 %v60, %v205
    %v207 = vpop.f32.mrb[0].mxu0
    %208 = vdwg.mxu0
    %v209 = vtanh.pop %v135
    %v210 = vtanh.pop %v137
    %v211 = vld [vmem:[%s5] sm:$0xff]
    %v212 = vld [vmem:[%s5 + $0x8] sm:$0xff]
    %v213 = vld [vmem:[%s5 + $0x10] sm:$0xff]
    %v214 = vld [vmem:[%s5 + $0x18] sm:$0xff]
    %v215 = vld [vmem:[%s5 + $0x20] sm:$0xff]
    %v216 = vld [vmem:[%s5 + $0x28] sm:$0xff]
    %v217 = vld [vmem:[%s5 + $0x30] sm:$0xff]
    %v218 = vld [vmem:[%s5 + $0x38] sm:$0xff]
    %v219 = vld [vmem:[%s5 + $0x40] sm:$0xff]
    %v220 = vld [vmem:[%s5 + $0x48] sm:$0xff]
    %v221 = vld [vmem:[%s5 + $0x50] sm:$0xff]
    %v222 = vld [vmem:[%s5 + $0x58] sm:$0xff]
    %v223 = vld [vmem:[%s5 + $0x60] sm:$0xff]
    %v224 = vld [vmem:[%s5 + $0x68] sm:$0xff]
    %v225 = vld [vmem:[%s5 + $0x70] sm:$0xff]
    %v226 = vld [vmem:[%s5 + $0x78] sm:$0xff]
    %v227 = vld [vmem:[%s6] sm:$0x1]
    %v229 = vlaneseq
    %v230 = vshrl.u32 %v229, 7
    %v231 = vsub.s32 0, %v230
    %v232 = vrot.slane %v227, %v231
    %234 = vmatprep.subr.mxu0 0.0
    %235 = vmatpush1.msra.mxu0 %v211
    %236 = vmatprep.subr.mxu0 0.0
    %237 = vmatpush1.msra.mxu0 %v212
    %238 = vmatprep.subr.mxu0 0.0
    %239 = vmatpush1.msra.mxu0 %v213
    %240 = vmatprep.subr.mxu0 0.0
    %241 = vmatpush1.msra.mxu0 %v214
    %242 = vmatprep.subr.mxu0 0.0
    %243 = vmatpush1.msra.mxu0 %v215
    %244 = vmatprep.subr.mxu0 0.0
    %245 = vmatpush1.msra.mxu0 %v216
    %246 = vmatprep.subr.mxu0 0.0
    %247 = vmatpush1.msra.mxu0 %v217
    %248 = vmatprep.subr.mxu0 0.0
    %249 = vmatpush1.msra.mxu0 %v218
    %250 = vmatprep.subr.mxu0 0.0
    %251 = vmatpush1.msra.mxu0 %v219
    %252 = vmatprep.subr.mxu0 0.0
    %253 = vmatpush1.msra.mxu0 %v220
    %254 = vmatprep.subr.mxu0 0.0
    %255 = vmatpush1.msra.mxu0 %v221
    %256 = vmatprep.subr.mxu0 0.0
    %257 = vmatpush1.msra.mxu0 %v222
    %258 = vmatprep.subr.mxu0 0.0
    %259 = vmatpush1.msra.mxu0 %v223
    %260 = vmatprep.subr.mxu0 0.0
    %261 = vmatpush1.msra.mxu0 %v224
    %262 = vmatprep.subr.mxu0 0.0
    %263 = vmatpush1.msra.mxu0 %v225
    %264 = vmatprep.subr.mxu0 0.0
    %265 = vmatpush1.msra.mxu0 %v226
    %266 = vmatprep.subr.mxu0 0.0
    %267 = vmatpush1.msra.mxu0 0.0
    %268 = vmatprep.subr.mxu0 0.0
    %269 = vmatpush1.msra.mxu0 0.0
    %270 = vmatprep.subr.mxu0 0.0
    %271 = vmatpush1.msra.mxu0 0.0
    %272 = vmatprep.subr.mxu0 0.0
    %273 = vmatpush1.msra.mxu0 0.0
    %274 = vmatprep.subr.mxu0 0.0
    %275 = vmatpush1.msra.mxu0 0.0
    %276 = vmatprep.subr.mxu0 0.0
    %277 = vmatpush1.msra.mxu0 0.0
    %278 = vmatprep.subr.mxu0 0.0
    %279 = vmatpush1.msra.mxu0 0.0
    %280 = vmatprep.subr.mxu0 0.0
    %281 = vmatpush1.msra.mxu0 0.0
    %282 = vmatprep.subr.mxu0 0.0
    %283 = vmatpush1.msra.mxu0 0.0
    %284 = vmatprep.subr.mxu0 0.0
    %285 = vmatpush1.msra.mxu0 0.0
    %286 = vmatprep.subr.mxu0 0.0
    %287 = vmatpush1.msra.mxu0 0.0
    %288 = vmatprep.subr.mxu0 0.0
    %289 = vmatpush1.msra.mxu0 0.0
    %290 = vmatprep.subr.mxu0 0.0
    %291 = vmatpush1.msra.mxu0 0.0
    %292 = vmatprep.subr.mxu0 0.0
    %293 = vmatpush1.msra.mxu0 0.0
    %294 = vmatprep.subr.mxu0 0.0
    %295 = vmatpush1.msra.mxu0 0.0
    %296 = vmatprep.subr.mxu0 0.0
    %297 = vmatpush1.msra.mxu0 0.0
    %298 = vmatprep.mubr.f32.mxu0 0.0
    %299 = vmatmul.mubr.f32.gmra.mrb[0].mxu0 %v209
    %v300 = vpop.f32.mrb[0].mxu0
    %v301 = vadd.f32 %v232, %v300
    %v302 = vpop.f32.mrb[0].mxu0
    %303 = vdwg.mxu0
    %v304 = vxor.u32 %v301, 2147483648
    %v305 = vmul.f32 %v304, 1.442695
    %v306 = vpow.pop %v305
    %v307 = vadd.f32 %v306, 1.0
    %v308 = vrcp.pop %v307
    %v309 = vmul.f32 1.0, %v308
    %s310 = scalar_lea.vmem %s5, 128
    %v311 = vld [vmem:[%s310] sm:$0xff]
    %v312 = vld [vmem:[%s310 + $0x8] sm:$0xff]
    %v313 = vld [vmem:[%s310 + $0x10] sm:$0xff]
    %v314 = vld [vmem:[%s310 + $0x18] sm:$0xff]
    %v315 = vld [vmem:[%s310 + $0x20] sm:$0xff]
    %v316 = vld [vmem:[%s310 + $0x28] sm:$0xff]
    %v317 = vld [vmem:[%s310 + $0x30] sm:$0xff]
    %v318 = vld [vmem:[%s310 + $0x38] sm:$0xff]
    %v319 = vld [vmem:[%s310 + $0x40] sm:$0xff]
    %v320 = vld [vmem:[%s310 + $0x48] sm:$0xff]
    %v321 = vld [vmem:[%s310 + $0x50] sm:$0xff]
    %v322 = vld [vmem:[%s310 + $0x58] sm:$0xff]
    %v323 = vld [vmem:[%s310 + $0x60] sm:$0xff]
    %v324 = vld [vmem:[%s310 + $0x68] sm:$0xff]
    %v325 = vld [vmem:[%s310 + $0x70] sm:$0xff]
    %v326 = vld [vmem:[%s310 + $0x78] sm:$0xff]
    %s327 = scalar_lea.vmem %s6, 1
    %v328 = vld [vmem:[%s327] sm:$0x1]
    %v330 = vlaneseq
    %v331 = vshrl.u32 %v330, 7
    %v332 = vsub.s32 0, %v331
    %v333 = vrot.slane %v328, %v332
    %335 = vmatprep.subr.mxu0 0.0
    %336 = vmatpush1.msra.mxu0 %v311
    %337 = vmatprep.subr.mxu0 0.0
    %338 = vmatpush1.msra.mxu0 %v312
    %339 = vmatprep.subr.mxu0 0.0
    %340 = vmatpush1.msra.mxu0 %v313
    %341 = vmatprep.subr.mxu0 0.0
    %342 = vmatpush1.msra.mxu0 %v314
    %343 = vmatprep.subr.mxu0 0.0
    %344 = vmatpush1.msra.mxu0 %v315
    %345 = vmatprep.subr.mxu0 0.0
    %346 = vmatpush1.msra.mxu0 %v316
    %347 = vmatprep.subr.mxu0 0.0
    %348 = vmatpush1.msra.mxu0 %v317
    %349 = vmatprep.subr.mxu0 0.0
    %350 = vmatpush1.msra.mxu0 %v318
    %351 = vmatprep.subr.mxu0 0.0
    %352 = vmatpush1.msra.mxu0 %v319
    %353 = vmatprep.subr.mxu0 0.0
    %354 = vmatpush1.msra.mxu0 %v320
    %355 = vmatprep.subr.mxu0 0.0
    %356 = vmatpush1.msra.mxu0 %v321
    %357 = vmatprep.subr.mxu0 0.0
    %358 = vmatpush1.msra.mxu0 %v322
    %359 = vmatprep.subr.mxu0 0.0
    %360 = vmatpush1.msra.mxu0 %v323
    %361 = vmatprep.subr.mxu0 0.0
    %362 = vmatpush1.msra.mxu0 %v324
    %363 = vmatprep.subr.mxu0 0.0
    %364 = vmatpush1.msra.mxu0 %v325
    %365 = vmatprep.subr.mxu0 0.0
    %366 = vmatpush1.msra.mxu0 %v326
    %367 = vmatprep.subr.mxu0 0.0
    %368 = vmatpush1.msra.mxu0 0.0
    %369 = vmatprep.subr.mxu0 0.0
    %370 = vmatpush1.msra.mxu0 0.0
    %371 = vmatprep.subr.mxu0 0.0
    %372 = vmatpush1.msra.mxu0 0.0
    %373 = vmatprep.subr.mxu0 0.0
    %374 = vmatpush1.msra.mxu0 0.0
    %375 = vmatprep.subr.mxu0 0.0
    %376 = vmatpush1.msra.mxu0 0.0
    %377 = vmatprep.subr.mxu0 0.0
    %378 = vmatpush1.msra.mxu0 0.0
    %379 = vmatprep.subr.mxu0 0.0
    %380 = vmatpush1.msra.mxu0 0.0
    %381 = vmatprep.subr.mxu0 0.0
    %382 = vmatpush1.msra.mxu0 0.0
    %383 = vmatprep.subr.mxu0 0.0
    %384 = vmatpush1.msra.mxu0 0.0
    %385 = vmatprep.subr.mxu0 0.0
    %386 = vmatpush1.msra.mxu0 0.0
    %387 = vmatprep.subr.mxu0 0.0
    %388 = vmatpush1.msra.mxu0 0.0
    %389 = vmatprep.subr.mxu0 0.0
    %390 = vmatpush1.msra.mxu0 0.0
    %391 = vmatprep.subr.mxu0 0.0
    %392 = vmatpush1.msra.mxu0 0.0
    %393 = vmatprep.subr.mxu0 0.0
    %394 = vmatpush1.msra.mxu0 0.0
    %395 = vmatprep.subr.mxu0 0.0
    %396 = vmatpush1.msra.mxu0 0.0
    %397 = vmatprep.subr.mxu0 0.0
    %398 = vmatpush1.msra.mxu0 0.0
    %399 = vmatprep.mubr.f32.mxu0 0.0
    %400 = vmatmul.mubr.f32.gmra.mrb[0].mxu0 %v210
    %v401 = vpop.f32.mrb[0].mxu0
    %v402 = vadd.f32 %v333, %v401
    %v403 = vpop.f32.mrb[0].mxu0
    %404 = vdwg.mxu0
    %v405 = vxor.u32 %v402, 2147483648
    %v406 = vmul.f32 %v405, 1.442695
    %v407 = vpow.pop %v406
    %v408 = vadd.f32 %v407, 1.0
    %v409 = vrcp.pop %v408
    %v410 = vmul.f32 1.0, %v409
    %v411 = vmul.f32 %v410, %v27
    %v412 = vld [vmem:[%s3] sm:$0xff]
    %v413 = vld [vmem:[%s3 + $0x8] sm:$0xff]
    %v414 = vld [vmem:[%s3 + $0x10] sm:$0xff]
    %v415 = vld [vmem:[%s3 + $0x18] sm:$0xff]
    %vm416 = vcmask 261120
    %v418 = vsel %vm416, %v411, 0
    %420 = vmatprep.subr.mxu0 0.0
    %421 = vmatpush1.msra.mxu0 %v412
    %422 = vmatprep.subr.mxu0 0.0
    %423 = vmatpush1.msra.mxu0 %v413
    %424 = vmatprep.subr.mxu0 0.0
    %425 = vmatpush1.msra.mxu0 %v414
    %426 = vmatprep.subr.mxu0 0.0
    %427 = vmatpush1.msra.mxu0 %v415
    %428 = vmatprep.subr.mxu0 0.0
    %429 = vmatpush1.msra.mxu0 0.0
    %430 = vmatprep.subr.mxu0 0.0
    %431 = vmatpush1.msra.mxu0 0.0
    %432 = vmatprep.subr.mxu0 0.0
    %433 = vmatpush1.msra.mxu0 0.0
    %434 = vmatprep.subr.mxu0 0.0
    %435 = vmatpush1.msra.mxu0 0.0
    %436 = vmatprep.subr.mxu0 0.0
    %437 = vmatpush1.msra.mxu0 0.0
    %438 = vmatprep.subr.mxu0 0.0
    %439 = vmatpush1.msra.mxu0 0.0
    %440 = vmatprep.subr.mxu0 0.0
    %441 = vmatpush1.msra.mxu0 0.0
    %442 = vmatprep.subr.mxu0 0.0
    %443 = vmatpush1.msra.mxu0 0.0
    %444 = vmatprep.subr.mxu0 0.0
    %445 = vmatpush1.msra.mxu0 0.0
    %446 = vmatprep.subr.mxu0 0.0
    %447 = vmatpush1.msra.mxu0 0.0
    %448 = vmatprep.subr.mxu0 0.0
    %449 = vmatpush1.msra.mxu0 0.0
    %450 = vmatprep.subr.mxu0 0.0
    %451 = vmatpush1.msra.mxu0 0.0
    %452 = vmatprep.subr.mxu0 0.0
    %453 = vmatpush1.msra.mxu0 0.0
    %454 = vmatprep.subr.mxu0 0.0
    %455 = vmatpush1.msra.mxu0 0.0
    %456 = vmatprep.subr.mxu0 0.0
    %457 = vmatpush1.msra.mxu0 0.0
    %458 = vmatprep.subr.mxu0 0.0
    %459 = vmatpush1.msra.mxu0 0.0
    %460 = vmatprep.subr.mxu0 0.0
    %461 = vmatpush1.msra.mxu0 0.0
    %462 = vmatprep.subr.mxu0 0.0
    %463 = vmatpush1.msra.mxu0 0.0
    %464 = vmatprep.subr.mxu0 0.0
    %465 = vmatpush1.msra.mxu0 0.0
    %466 = vmatprep.subr.mxu0 0.0
    %467 = vmatpush1.msra.mxu0 0.0
    %468 = vmatprep.subr.mxu0 0.0
    %469 = vmatpush1.msra.mxu0 0.0
    %470 = vmatprep.subr.mxu0 0.0
    %471 = vmatpush1.msra.mxu0 0.0
    %472 = vmatprep.subr.mxu0 0.0
    %473 = vmatpush1.msra.mxu0 0.0
    %474 = vmatprep.subr.mxu0 0.0
    %475 = vmatpush1.msra.mxu0 0.0
    %476 = vmatprep.subr.mxu0 0.0
    %477 = vmatpush1.msra.mxu0 0.0
    %478 = vmatprep.subr.mxu0 0.0
    %479 = vmatpush1.msra.mxu0 0.0
    %480 = vmatprep.subr.mxu0 0.0
    %481 = vmatpush1.msra.mxu0 0.0
    %482 = vmatprep.subr.mxu0 0.0
    %483 = vmatpush1.msra.mxu0 0.0
    %484 = vmatprep.mubr.f32.mxu0 0.0
    %485 = vmatmul.mubr.f32.gmra.mrb[0].mxu0 %v418
    %v486 = vpop.f32.mrb[0].mxu0
    %v487 = vadd.f32 0.0, %v486
    %v488 = vpop.f32.mrb[0].mxu0
    %489 = vdwg.mxu0
    %v490 = vadd.f32 %v206, %v487
    %v491 = vtanh.pop %v490
    %s492 = scalar_lea.vmem %s5, 256
    %v493 = vld [vmem:[%s492] sm:$0xff]
    %v494 = vld [vmem:[%s492 + $0x8] sm:$0xff]
    %v495 = vld [vmem:[%s492 + $0x10] sm:$0xff]
    %v496 = vld [vmem:[%s492 + $0x18] sm:$0xff]
    %v497 = vld [vmem:[%s492 + $0x20] sm:$0xff]
    %v498 = vld [vmem:[%s492 + $0x28] sm:$0xff]
    %v499 = vld [vmem:[%s492 + $0x30] sm:$0xff]
    %v500 = vld [vmem:[%s492 + $0x38] sm:$0xff]
    %v501 = vld [vmem:[%s492 + $0x40] sm:$0xff]
    %v502 = vld [vmem:[%s492 + $0x48] sm:$0xff]
    %v503 = vld [vmem:[%s492 + $0x50] sm:$0xff]
    %v504 = vld [vmem:[%s492 + $0x58] sm:$0xff]
    %v505 = vld [vmem:[%s492 + $0x60] sm:$0xff]
    %v506 = vld [vmem:[%s492 + $0x68] sm:$0xff]
    %v507 = vld [vmem:[%s492 + $0x70] sm:$0xff]
    %v508 = vld [vmem:[%s492 + $0x78] sm:$0xff]
    %s509 = scalar_lea.vmem %s6, 2
    %v510 = vld [vmem:[%s509] sm:$0x1]
    %v512 = vlaneseq
    %v513 = vshrl.u32 %v512, 7
    %v514 = vsub.s32 0, %v513
    %v515 = vrot.slane %v510, %v514
    %517 = vmatprep.subr.mxu0 0.0
    %518 = vmatpush1.msra.mxu0 %v493
    %519 = vmatprep.subr.mxu0 0.0
    %520 = vmatpush1.msra.mxu0 %v494
    %521 = vmatprep.subr.mxu0 0.0
    %522 = vmatpush1.msra.mxu0 %v495
    %523 = vmatprep.subr.mxu0 0.0
    %524 = vmatpush1.msra.mxu0 %v496
    %525 = vmatprep.subr.mxu0 0.0
    %526 = vmatpush1.msra.mxu0 %v497
    %527 = vmatprep.subr.mxu0 0.0
    %528 = vmatpush1.msra.mxu0 %v498
    %529 = vmatprep.subr.mxu0 0.0
    %530 = vmatpush1.msra.mxu0 %v499
    %531 = vmatprep.subr.mxu0 0.0
    %532 = vmatpush1.msra.mxu0 %v500
    %533 = vmatprep.subr.mxu0 0.0
    %534 = vmatpush1.msra.mxu0 %v501
    %535 = vmatprep.subr.mxu0 0.0
    %536 = vmatpush1.msra.mxu0 %v502
    %537 = vmatprep.subr.mxu0 0.0
    %538 = vmatpush1.msra.mxu0 %v503
    %539 = vmatprep.subr.mxu0 0.0
    %540 = vmatpush1.msra.mxu0 %v504
    %541 = vmatprep.subr.mxu0 0.0
    %542 = vmatpush1.msra.mxu0 %v505
    %543 = vmatprep.subr.mxu0 0.0
    %544 = vmatpush1.msra.mxu0 %v506
    %545 = vmatprep.subr.mxu0 0.0
    %546 = vmatpush1.msra.mxu0 %v507
    %547 = vmatprep.subr.mxu0 0.0
    %548 = vmatpush1.msra.mxu0 %v508
    %549 = vmatprep.subr.mxu0 0.0
    %550 = vmatpush1.msra.mxu0 0.0
    %551 = vmatprep.subr.mxu0 0.0
    %552 = vmatpush1.msra.mxu0 0.0
    %553 = vmatprep.subr.mxu0 0.0
    %554 = vmatpush1.msra.mxu0 0.0
    %555 = vmatprep.subr.mxu0 0.0
    %556 = vmatpush1.msra.mxu0 0.0
    %557 = vmatprep.subr.mxu0 0.0
    %558 = vmatpush1.msra.mxu0 0.0
    %559 = vmatprep.subr.mxu0 0.0
    %560 = vmatpush1.msra.mxu0 0.0
    %561 = vmatprep.subr.mxu0 0.0
    %562 = vmatpush1.msra.mxu0 0.0
    %563 = vmatprep.subr.mxu0 0.0
    %564 = vmatpush1.msra.mxu0 0.0
    %565 = vmatprep.subr.mxu0 0.0
    %566 = vmatpush1.msra.mxu0 0.0
    %567 = vmatprep.subr.mxu0 0.0
    %568 = vmatpush1.msra.mxu0 0.0
    %569 = vmatprep.subr.mxu0 0.0
    %570 = vmatpush1.msra.mxu0 0.0
    %571 = vmatprep.subr.mxu0 0.0
    %572 = vmatpush1.msra.mxu0 0.0
    %573 = vmatprep.subr.mxu0 0.0
    %574 = vmatpush1.msra.mxu0 0.0
    %575 = vmatprep.subr.mxu0 0.0
    %576 = vmatpush1.msra.mxu0 0.0
    %577 = vmatprep.subr.mxu0 0.0
    %578 = vmatpush1.msra.mxu0 0.0
    %579 = vmatprep.subr.mxu0 0.0
    %580 = vmatpush1.msra.mxu0 0.0
    %581 = vmatprep.mubr.f32.mxu0 0.0
    %582 = vmatmul.mubr.f32.gmra.mrb[0].mxu0 %v491
    %v583 = vpop.f32.mrb[0].mxu0
    %v584 = vadd.f32 %v515, %v583
    %v585 = vpop.f32.mrb[0].mxu0
    %586 = vdwg.mxu0
    %v587 = vsub.f32 1.0, %v309
    %v588 = vmul.f32 %v587, %v584
    %v589 = vmul.f32 %v309, %v27
    %v590 = vadd.f32 %v588, %v589
    %592 = vset.pattern.permute.xlu0 0
    %593 = vperm.xlu0 %592, %v28
    %v594 = vpop.permute.xlu0 %593
    %v596 = vmul.f32 %v594, %v590
    %v597 = vsub.f32 1.0, %v28
    %599 = vset.pattern.permute.xlu0 0
    %600 = vperm.xlu0 %599, %v597
    %v601 = vpop.permute.xlu0 %600
    %v603 = vmul.f32 %v601, %v27
    %v604 = vadd.f32 %v596, %v603
    %605 = vst.msk [vmem:[#allocation2] sm:$0xff] %vm416, %v604
    // Predicated region
    $region30: #{tpu_custom_call.1} parent=1 // pred_check
      _
    $region31: #{tpu_custom_call.1} parent=1 // pred_check_branch
      %607 = sbr.rel (0) target = $region33
    $region32: #{tpu_custom_call.1} parent=1 // pred_region
      %s609 = ssub.s32 128, 128
      %610 = vsyncadd [#allocation3], %s609
      %s612 = sshll.u32 [#allocation2], 4
      %s613 = int_to_ptr.vmem [resolvable:$true] %s612
      %615 = dma.vmem_to_hbm [thread:$0]  %s613, 128, %s7, [#allocation3]
    $region33: #{tpu_custom_call.1} parent=1 // pred_fallthru
      _
    // Predicated region
    $region34: #{tpu_custom_call.1} parent=1 // pred_check
      _
    $region35: #{tpu_custom_call.1} parent=1 // pred_check_branch
      %617 = sbr.rel (0) target = $region37
    $region36: #{tpu_custom_call.1} parent=1 // pred_region
      %618 = dma.done [#allocation3], 128
    $region37: #{tpu_custom_call.1} parent=1 // pred_fallthru
      _
    %619 = vsyncpa [#allocation3], 1

</llo_original>
